<compile_context>
chip_gen: v5e
topology: v5e:2x2
jax: 0.10.0
libtpu: 0.0.40
codegen_flags: <defaults>
</compile_context>

<pallas_src>
import functools

import jax
import jax.numpy as jnp
from jax import lax
from jax.experimental import pallas as pl
from jax.experimental.pallas import tpu as pltpu


# ----------------------------- linear: x @ W + b ------------------------------
def _linear_kernel(x_ref, w_ref, b_ref, o_ref):
    acc = jnp.dot(x_ref[...], w_ref[...], preferred_element_type=jnp.float32)
    o_ref[...] = (acc + b_ref[...].astype(jnp.float32)).astype(o_ref.dtype)


def _linear(x2d, w, b):
    """x2d: (M, K), w: (K, Nout), b: (Nout,) -> (M, Nout)."""
    M, K = x2d.shape
    _, Nout = w.shape
    b2d = b.reshape(1, Nout)
    tm = M if M <= 1024 else 512        # 512 is sublane-aligned
    tn = Nout if Nout <= 1024 else 512  # 512 is lane-aligned
    grid = (pl.cdiv(M, tm), pl.cdiv(Nout, tn))
    return pl.pallas_call(
        _linear_kernel,
        out_shape=jax.ShapeDtypeStruct((M, Nout), x2d.dtype),
        grid=grid,
        in_specs=[
            pl.BlockSpec((tm, K), lambda i, j: (i, 0)),
            pl.BlockSpec((K, tn), lambda i, j: (0, j)),
            pl.BlockSpec((1, tn), lambda i, j: (0, j)),
        ],
        out_specs=pl.BlockSpec((tm, tn), lambda i, j: (i, j)),
        compiler_params=pltpu.CompilerParams(
            dimension_semantics=("parallel", "parallel")),
    )(x2d, w, b2d)


# ------------------------- flash attention (online softmax) -------------------
def _flash_attn_kernel(q_ref, k_ref, v_ref, o_ref, m_sc, l_sc, acc_sc, q_sc, *,
                       scale, num_heads, head_dim, seq_len, block_k,
                       q_col, k_col, v_col):
    """One (q-tile, kv-tile) online-softmax step for all heads.

    q_ref holds the Q columns at [q_col, q_col+C); k_ref/v_ref hold K/V columns
    at [k_col, .) / [v_col, .).  o_ref is the (tq, C) output block, written on
    the last kv step.  Scratch: m_sc/l_sc (tq, nh), acc_sc/q_sc (tq, C), f32.
    """
    dim = num_heads * head_dim
    ki = pl.program_id(2)

    @pl.when(ki == 0)
    def _():
        m_sc[...] = jnp.full(m_sc.shape, -jnp.inf, m_sc.dtype)
        l_sc[...] = jnp.zeros(l_sc.shape, l_sc.dtype)
        acc_sc[...] = jnp.zeros(acc_sc.shape, acc_sc.dtype)
        # Hoist q * scale out of the kv loop (computed once per q-tile).
        q_sc[...] = q_ref[:, q_col:q_col + dim].astype(jnp.float32) * scale

    k = k_ref[:, k_col:k_col + dim].astype(jnp.float32)   # (tk, C)
    v = v_ref[:, v_col:v_col + dim]                       # (tk, C)

    tq = q_sc.shape[0]
    col_mask = None
    if seq_len % block_k != 0:                             # static: ragged kv tail
        col = ki * block_k + lax.broadcasted_iota(jnp.int32, (tq, block_k), 1)
        col_mask = col < seq_len

    for h in range(num_heads):                             # static unroll
        hs = h * head_dim
        he = hs + head_dim
        # s = q_h @ k_h^T without materializing a transpose of k.
        s = lax.dot_general(q_sc[:, hs:he], k[:, hs:he],
                            (((1,), (1,)), ((), ())),
                            preferred_element_type=jnp.float32)      # (tq, tk)
        if col_mask is not None:
            s = jnp.where(col_mask, s, -jnp.inf)

        m_prev = m_sc[:, h:h + 1]
        m_new = jnp.maximum(m_prev, jnp.max(s, axis=-1, keepdims=True))
        alpha = jnp.exp(m_prev - m_new)
        p = jnp.exp(s - m_new)
        l_sc[:, h:h + 1] = alpha * l_sc[:, h:h + 1] + jnp.sum(
            p, axis=-1, keepdims=True)
        acc_sc[:, hs:he] = alpha * acc_sc[:, hs:he] + jnp.dot(
            p.astype(v.dtype), v[:, hs:he], preferred_element_type=jnp.float32)
        m_sc[:, h:h + 1] = m_new

    @pl.when(ki == pl.num_programs(2) - 1)
    def _():
        pieces = []
        for h in range(num_heads):
            hs = h * head_dim
            inv_l = pl.reciprocal(l_sc[:, h:h + 1], approx=True)     # EUP slot
            pieces.append(acc_sc[:, hs:hs + head_dim] * inv_l)
        # Single lane-dense (tq, C) store.
        o_ref[...] = jnp.concatenate(pieces, axis=-1).astype(o_ref.dtype)


def _flash_attention(qkv, *, num_heads, scale, out_dtype):
    """qkv: (B, N, 3C) with columns [Q | K | V] -> attention output (B, N, C)."""
    B, N, three_c = qkv.shape
    C = three_c // 3
    head_dim = C // num_heads

    t = 512 if C <= 1024 else 256           # keep working set well under VMEM
    tq = N if N <= t else t
    tk = N if N <= t else t
    grid = (B, pl.cdiv(N, tq), pl.cdiv(N, tk))

    if C % 128 == 0:
        # Lane-aligned head blocks: separate width-C column windows for Q/K/V,
        # indexed straight out of the packed QKV projection (no transpose).
        in_specs = [
            pl.BlockSpec((None, tq, C), lambda b, qi, ki: (b, qi, 0)),
            pl.BlockSpec((None, tk, C), lambda b, qi, ki: (b, ki, 1)),
            pl.BlockSpec((None, tk, C), lambda b, qi, ki: (b, ki, 2)),
        ]
        cols = dict(q_col=0, k_col=0, v_col=0)
    else:
        # TODO(synk): C not a multiple of 128 -- fall back to full-width 3C
        # blocks (legal for any C) at the cost of extra DMA bandwidth.
        in_specs = [
            pl.BlockSpec((None, tq, three_c), lambda b, qi, ki: (b, qi, 0)),
            pl.BlockSpec((None, tk, three_c), lambda b, qi, ki: (b, ki, 0)),
            pl.BlockSpec((None, tk, three_c), lambda b, qi, ki: (b, ki, 0)),
        ]
        cols = dict(q_col=0, k_col=C, v_col=2 * C)

    kernel = functools.partial(
        _flash_attn_kernel, scale=scale, num_heads=num_heads,
        head_dim=head_dim, seq_len=N, block_k=tk, **cols)

    return pl.pallas_call(
        kernel,
        out_shape=jax.ShapeDtypeStruct((B, N, C), out_dtype),
        grid_spec=pltpu.PrefetchScalarGridSpec(
            num_scalar_prefetch=0,
            grid=grid,
            in_specs=in_specs,
            out_specs=pl.BlockSpec((None, tq, C), lambda b, qi, ki: (b, qi, 0)),
            scratch_shapes=[
                pltpu.VMEM((tq, num_heads), jnp.float32),   # running max
                pltpu.VMEM((tq, num_heads), jnp.float32),   # running denom
                pltpu.VMEM((tq, C), jnp.float32),           # output accumulator
                pltpu.VMEM((tq, C), jnp.float32),           # pre-scaled q tile
            ],
        ),
        compiler_params=pltpu.CompilerParams(
            dimension_semantics=("parallel", "parallel", "arbitrary")),
    )(qkv, qkv, qkv)


# ------------------------------- full forward ---------------------------------
def attention_forward(x, qkv_w, qkv_b, proj_w, proj_b, *, num_heads, policy=None):
    """Pallas equivalent of Attention.forward(x, policy=None, H, W)."""
    # TODO(synk): add_decomposed_rel_pos (use_rel_pos=True) and the
    # policy-masked softmax (softmax_with_policy) paths are not implemented;
    # this covers the default forward (policy=None, use_rel_pos=False).
    assert policy is None, "policy-masked softmax not implemented"
    if x.ndim == 4:
        B, H, W, C = x.shape
        N = H * W
    else:
        B, N, C = x.shape
    assert C % num_heads == 0
    head_dim = C // num_heads
    scale = head_dim ** (-0.5)

    x2d = x.reshape(B * N, C)
    qkv = _linear(x2d, qkv_w, qkv_b)                             # (B*N, 3C)
    o = _flash_attention(qkv.reshape(B, N, 3 * C),
                         num_heads=num_heads, scale=scale,
                         out_dtype=x.dtype)                      # (B, N, C)
    out = _linear(o.reshape(B * N, C), proj_w, proj_b)           # (B*N, C)
    return out.reshape(x.shape)


# --------------------------------- reference -----------------------------------
def _reference(x, qkv_w, qkv_b, proj_w, proj_b, *, num_heads):
    hi = lax.Precision.HIGHEST
    B, H, W, C = x.shape
    N = H * W
    hd = C // num_heads
    scale = hd ** (-0.5)
    qkv = jnp.dot(x.reshape(B * N, C), qkv_w, precision=hi) + qkv_b
    qkv = qkv.reshape(B, N, 3, num_heads, hd)
    qkv = jnp.transpose(qkv, (2, 0, 3, 1, 4)).reshape(3, B * num_heads, N, hd)
    q, k, v = qkv[0], qkv[1], qkv[2]
    attn = jnp.einsum("bnd,bmd->bnm", q * scale, k, precision=hi)
    attn = jax.nn.softmax(attn, axis=-1)
    o = jnp.einsum("bnm,bmd->bnd", attn, v, precision=hi)
    o = jnp.transpose(o.reshape(B, num_heads, H, W, hd), (0, 2, 3, 1, 4))
    out = jnp.dot(o.reshape(B * N, C), proj_w, precision=hi) + proj_b
    return out.reshape(B, H, W, C)


if __name__ == "__main__":
    key = jax.random.PRNGKey(0)
    B, H, W, C, num_heads = 2, 8, 8, 128, 2   # N = 64, head_dim = 64
    k1, k2, k3, k4, k5 = jax.random.split(key, 5)
    x = jax.random.normal(k1, (B, H, W, C), dtype=jnp.float32)
    qkv_w = 0.1 * jax.random.normal(k2, (C, 3 * C), dtype=jnp.float32)
    qkv_b = 0.1 * jax.random.normal(k3, (3 * C,), dtype=jnp.float32)
    proj_w = 0.1 * jax.random.normal(k4, (C, C), dtype=jnp.float32)
    proj_b = 0.1 * jax.random.normal(k5, (C,), dtype=jnp.float32)

    out = attention_forward(x, qkv_w, qkv_b, proj_w, proj_b, num_heads=num_heads)
    out = jax.block_until_ready(out)

    ref = _reference(x, qkv_w, qkv_b, proj_w, proj_b, num_heads=num_heads)
    assert out.shape == (B, H, W, C), (out.shape, (B, H, W, C))
    assert out.dtype == x.dtype, (out.dtype, x.dtype)
    max_err = float(jnp.max(jnp.abs(out - ref)))
    assert jnp.allclose(out, ref, atol=1e-2, rtol=1e-2), f"max_err={max_err}"

    print("KERNEL_OK")
</pallas_src>

<mosaic_0001>
module attributes {stable_mosaic.version = 11 : i64} {
  func.func @_linear_kernel(%arg0: i32, %arg1: i32, %arg2: memref<128x128xf32, #tpu.memory_space<vmem>>, %arg3: memref<128x384xf32, #tpu.memory_space<vmem>>, %arg4: memref<1x384xf32, #tpu.memory_space<vmem>>, %arg5: memref<128x384xf32, #tpu.memory_space<vmem>>) attributes {dimension_semantics = [#tpu.dimension_semantics<parallel>, #tpu.dimension_semantics<parallel>], iteration_bounds = array<i64: 1, 1>, scalar_prefetch = 0 : i64, scratch_operands = 0 : i64, tpu.core_type = #tpu.core_type<tc>, window_params = [{transform_indices = @transform_0, window_bounds = array<i64: 128, 128>}, {transform_indices = @transform_1, window_bounds = array<i64: 128, 384>}, {transform_indices = @transform_2, window_bounds = array<i64: 1, 384>}, {transform_indices = @transform_3, window_bounds = array<i64: 128, 384>}]} {
    %c0 = arith.constant 0 : index
    %c0_0 = arith.constant 0 : index
    %0 = vector.load %arg2[%c0, %c0_0] : memref<128x128xf32, #tpu.memory_space<vmem>>, vector<128x128xf32>
    %c0_1 = arith.constant 0 : index
    %c0_2 = arith.constant 0 : index
    %1 = vector.load %arg3[%c0_1, %c0_2] : memref<128x384xf32, #tpu.memory_space<vmem>>, vector<128x384xf32>
    %cst = arith.constant dense<0.000000e+00> : vector<128x384xf32>
    %2 = tpu.matmul %0, %1, %cst {dimension_numbers = #tpu.dot_dimension_numbers<[1], [0], [0], [1], [0, 0, 1, 1], [], []>} : vector<128x128xf32>, vector<128x384xf32>, vector<128x384xf32> -> vector<128x384xf32>
    %c0_3 = arith.constant 0 : index
    %c0_4 = arith.constant 0 : index
    %3 = vector.load %arg4[%c0_3, %c0_4] : memref<1x384xf32, #tpu.memory_space<vmem>>, vector<1x384xf32>
    %4 = vector.broadcast %3 : vector<1x384xf32> to vector<128x384xf32>
    %5 = arith.addf %2, %4 : vector<128x384xf32>
    %c0_5 = arith.constant 0 : index
    %c0_6 = arith.constant 0 : index
    %6 = vector.load %arg5[%c0_5, %c0_6] : memref<128x384xf32, #tpu.memory_space<vmem>>, vector<128x384xf32>
    tpu.vector_store %arg5[%c0_5, %c0_6], %5 {strides = array<i32>} : memref<128x384xf32, #tpu.memory_space<vmem>>, vector<128x384xf32>,
    return
  }
  func.func @transform_0(%arg0: i32, %arg1: i32) -> (i32, i32) {
    %c0_i32 = arith.constant 0 : i32
    %c0_i32_0 = arith.constant 0 : i32
    return %arg0, %c0_i32 : i32, i32
  }
  func.func @transform_1(%arg0: i32, %arg1: i32) -> (i32, i32) {
    %c0_i32 = arith.constant 0 : i32
    %c0_i32_0 = arith.constant 0 : i32
    return %c0_i32, %arg1 : i32, i32
  }
  func.func @transform_2(%arg0: i32, %arg1: i32) -> (i32, i32) {
    %c0_i32 = arith.constant 0 : i32
    %c0_i32_0 = arith.constant 0 : i32
    return %c0_i32, %arg1 : i32, i32
  }
  func.func @transform_3(%arg0: i32, %arg1: i32) -> (i32, i32) {
    %c0_i32 = arith.constant 0 : i32
    return %arg0, %arg1 : i32, i32
  }
}

</mosaic_0001>

<llo_original>
// kernel: tpu_custom_call.1
$region0: #{tpu_custom_call.1}
  #allocation0 [shape = 'u32[]', space=smem, size = 0x4, offset = 0x4, fixed_abs, tag = 'smem constant byte address 0x4 - core index']
  #allocation1 [shape = 'u32[72,128]{1,0:T(1,128)}', space=vmem, size = 0x9000, scoped, tag = 'internal scratch']
  %s0 = inlined_call_operand.hbm [shape: f32[128,128], index: 0, kind: input, shape index: {}]
  %s1 = inlined_call_operand.hbm [shape: f32[128,384], index: 1, kind: input, shape index: {}]
  %s2 = inlined_call_operand.hbm [shape: f32[1,384], index: 2, kind: input, shape index: {}]
  %s3 = inlined_call_operand.hbm [shape: f32[128,384], index: 3, kind: output, shape index: {}]
  %s4 = sld [smem:[#allocation0]]
  $region34: #{tpu_custom_call.1} parent=0
    _
  %s6 = ssub.s32 1, %s4
  %s7 = scalar_select 0, %s6, %s4
  $region1: #{tpu_custom_call.1} parent=0
    #allocation2 [shape = 'u8[65536]{0}', space=vmem, size = 0x10000, scoped, tag = 'input window, operand 0, single buffered']
    #allocation3 [shape = 's32[1]{0}', space=sflag, size = 0x4, scoped, tag = 'scoped memory for tpu_custom_call.1']
    #allocation4 [shape = 's32[1]{0}', space=sflag, size = 0x4, scoped, tag = 'scoped memory for tpu_custom_call.1']
    #allocation5 [shape = 'u8[196608]{0}', space=vmem, size = 0x30000, scoped, tag = 'input window, operand 1, single buffered']
    #allocation6 [shape = 's32[1]{0}', space=sflag, size = 0x4, scoped, tag = 'scoped memory for tpu_custom_call.1']
    #allocation7 [shape = 'u8[1536]{0}', space=vmem, size = 0x800, scoped, tag = 'input window, operand 2, single buffered']
    #allocation8 [shape = 'u8[196608]{0}', space=vmem, size = 0x30000, scoped, tag = 'output window, operand 0, single buffered']
    %8 = vsyncpa [#allocation3], 0
    %9 = vsyncpa [#allocation6], 0
    %10 = vsyncpa [#allocation4], 0
    // Predicated region
    $region2: #{tpu_custom_call.1} parent=1 // pred_check
      _
    $region3: #{tpu_custom_call.1} parent=1 // pred_check_branch
      %12 = sbr.rel (0) target = $region5
    $region4: #{tpu_custom_call.1} parent=1 // pred_region
      %14 = vsyncadd [#allocation3], 0
      %s15 = sshll.u32 %s0, 4
      %s16 = int_to_ptr.hbm [resolvable:$true] %s15
      %s17 = sshll.u32 [#allocation2], 4
      %s18 = int_to_ptr.vmem [resolvable:$true] %s17
      %23 = dma.hbm_to_vmem [thread:$0]  %s16, 2048, %s18, [#allocation3], 128, 128, 8
    $region5: #{tpu_custom_call.1} parent=1 // pred_fallthru
      _
    // Predicated region
    $region6: #{tpu_custom_call.1} parent=1 // pred_check
      _
    $region7: #{tpu_custom_call.1} parent=1 // pred_check_branch
      %25 = sbr.rel (0) target = $region9
    $region8: #{tpu_custom_call.1} parent=1 // pred_region
      %27 = vsyncadd [#allocation6], 0
      %s28 = sshll.u32 %s1, 4
      %s29 = int_to_ptr.hbm [resolvable:$true] %s28
      %s30 = sshll.u32 [#allocation5], 4
      %s31 = int_to_ptr.vmem [resolvable:$true] %s30
      %36 = dma.hbm_to_vmem [thread:$0]  %s29, 6144, %s31, [#allocation6], 384, 384, 24
    $region9: #{tpu_custom_call.1} parent=1 // pred_fallthru
      _
    // Predicated region
    $region10: #{tpu_custom_call.1} parent=1 // pred_check
      _
    $region11: #{tpu_custom_call.1} parent=1 // pred_check_branch
      %38 = sbr.rel (0) target = $region13
    $region12: #{tpu_custom_call.1} parent=1 // pred_region
      %40 = vsyncadd [#allocation6], 0
      %s42 = sshll.u32 %s2, 4
      %s43 = int_to_ptr.hbm [resolvable:$true] %s42
      %s44 = sshll.u32 [#allocation7], 4
      %s45 = int_to_ptr.vmem [resolvable:$true] %s44
      %47 = dma.hbm_to_vmem [thread:$0]  %s43, 48, %s45, [#allocation6]
    $region13: #{tpu_custom_call.1} parent=1 // pred_fallthru
      _
    // Predicated region
    $region14: #{tpu_custom_call.1} parent=1 // pred_check
      _
    $region15: #{tpu_custom_call.1} parent=1 // pred_check_branch
      %49 = sbr.rel (0) target = $region17
    $region16: #{tpu_custom_call.1} parent=1 // pred_region
      %51 = dma.done [#allocation3], 2048
    $region17: #{tpu_custom_call.1} parent=1 // pred_fallthru
      _
    // Predicated region
    $region18: #{tpu_custom_call.1} parent=1 // pred_check
      _
    $region19: #{tpu_custom_call.1} parent=1 // pred_check_branch
      %53 = sbr.rel (0) target = $region21
    $region20: #{tpu_custom_call.1} parent=1 // pred_region
      %55 = dma.done [#allocation6], 6144
    $region21: #{tpu_custom_call.1} parent=1 // pred_fallthru
      _
    // Predicated region
    $region22: #{tpu_custom_call.1} parent=1 // pred_check
      _
    $region23: #{tpu_custom_call.1} parent=1 // pred_check_branch
      %57 = sbr.rel (0) target = $region25
    $region24: #{tpu_custom_call.1} parent=1 // pred_region
      %59 = dma.done [#allocation6], 48
    $region25: #{tpu_custom_call.1} parent=1 // pred_fallthru
      _
    %v60 = vld [vmem:[#allocation2] sm:$0xff]
    %v61 = vld [vmem:[#allocation2 + $0x8] sm:$0xff]
    %v62 = vld [vmem:[#allocation2 + $0x10] sm:$0xff]
    %v63 = vld [vmem:[#allocation2 + $0x18] sm:$0xff]
    %v64 = vld [vmem:[#allocation2 + $0x20] sm:$0xff]
    %v65 = vld [vmem:[#allocation2 + $0x28] sm:$0xff]
    %v66 = vld [vmem:[#allocation2 + $0x30] sm:$0xff]
    %v67 = vld [vmem:[#allocation2 + $0x38] sm:$0xff]
    %v68 = vld [vmem:[#allocation2 + $0x40] sm:$0xff]
    %v69 = vld [vmem:[#allocation2 + $0x48] sm:$0xff]
    %v70 = vld [vmem:[#allocation2 + $0x50] sm:$0xff]
    %v71 = vld [vmem:[#allocation2 + $0x58] sm:$0xff]
    %v72 = vld [vmem:[#allocation2 + $0x60] sm:$0xff]
    %v73 = vld [vmem:[#allocation2 + $0x68] sm:$0xff]
    %v74 = vld [vmem:[#allocation2 + $0x70] sm:$0xff]
    %v75 = vld [vmem:[#allocation2 + $0x78] sm:$0xff]
    %v76 = vld [vmem:[#allocation5] sm:$0xff]
    %v77 = vld [vmem:[#allocation5 + $0x8] sm:$0xff]
    %v78 = vld [vmem:[#allocation5 + $0x10] sm:$0xff]
    %v79 = vld [vmem:[#allocation5 + $0x18] sm:$0xff]
    %v80 = vld [vmem:[#allocation5 + $0x20] sm:$0xff]
    %v81 = vld [vmem:[#allocation5 + $0x28] sm:$0xff]
    %v82 = vld [vmem:[#allocation5 + $0x30] sm:$0xff]
    %v83 = vld [vmem:[#allocation5 + $0x38] sm:$0xff]
    %v84 = vld [vmem:[#allocation5 + $0x40] sm:$0xff]
    %v85 = vld [vmem:[#allocation5 + $0x48] sm:$0xff]
    %v86 = vld [vmem:[#allocation5 + $0x50] sm:$0xff]
    %v87 = vld [vmem:[#allocation5 + $0x58] sm:$0xff]
    %v88 = vld [vmem:[#allocation5 + $0x60] sm:$0xff]
    %v89 = vld [vmem:[#allocation5 + $0x68] sm:$0xff]
    %v90 = vld [vmem:[#allocation5 + $0x70] sm:$0xff]
    %v91 = vld [vmem:[#allocation5 + $0x78] sm:$0xff]
    %v92 = vld [vmem:[#allocation5 + $0x80] sm:$0xff]
    %v93 = vld [vmem:[#allocation5 + $0x88] sm:$0xff]
    %v94 = vld [vmem:[#allocation5 + $0x90] sm:$0xff]
    %v95 = vld [vmem:[#allocation5 + $0x98] sm:$0xff]
    %v96 = vld [vmem:[#allocation5 + $0xa0] sm:$0xff]
    %v97 = vld [vmem:[#allocation5 + $0xa8] sm:$0xff]
    %v98 = vld [vmem:[#allocation5 + $0xb0] sm:$0xff]
    %v99 = vld [vmem:[#allocation5 + $0xb8] sm:$0xff]
    %v100 = vld [vmem:[#allocation5 + $0xc0] sm:$0xff]
    %v101 = vld [vmem:[#allocation5 + $0xc8] sm:$0xff]
    %v102 = vld [vmem:[#allocation5 + $0xd0] sm:$0xff]
    %v103 = vld [vmem:[#allocation5 + $0xd8] sm:$0xff]
    %v104 = vld [vmem:[#allocation5 + $0xe0] sm:$0xff]
    %v105 = vld [vmem:[#allocation5 + $0xe8] sm:$0xff]
    %v106 = vld [vmem:[#allocation5 + $0xf0] sm:$0xff]
    %v107 = vld [vmem:[#allocation5 + $0xf8] sm:$0xff]
    %v108 = vld [vmem:[#allocation5 + $0x100] sm:$0xff]
    %v109 = vld [vmem:[#allocation5 + $0x108] sm:$0xff]
    %v110 = vld [vmem:[#allocation5 + $0x110] sm:$0xff]
    %v111 = vld [vmem:[#allocation5 + $0x118] sm:$0xff]
    %v112 = vld [vmem:[#allocation5 + $0x120] sm:$0xff]
    %v113 = vld [vmem:[#allocation5 + $0x128] sm:$0xff]
    %v114 = vld [vmem:[#allocation5 + $0x130] sm:$0xff]
    %v115 = vld [vmem:[#allocation5 + $0x138] sm:$0xff]
    %v116 = vld [vmem:[#allocation5 + $0x140] sm:$0xff]
    %v117 = vld [vmem:[#allocation5 + $0x148] sm:$0xff]
    %v118 = vld [vmem:[#allocation5 + $0x150] sm:$0xff]
    %v119 = vld [vmem:[#allocation5 + $0x158] sm:$0xff]
    %v120 = vld [vmem:[#allocation5 + $0x160] sm:$0xff]
    %v121 = vld [vmem:[#allocation5 + $0x168] sm:$0xff]
    %v122 = vld [vmem:[#allocation5 + $0x170] sm:$0xff]
    %v123 = vld [vmem:[#allocation5 + $0x178] sm:$0xff]
    %v124 = vld [vmem:[#allocation7] sm:$0x7]
    %v126 = vperm.slane %v124, 0
    %v127 = vperm.slane %v124, 1
    %v128 = vperm.slane %v124, 2
    %132 = vmatpush.msra.mxu0 %v121
    %133 = vmatpush.msra.mxu0 %v118
    %134 = vmatpush.msra.mxu0 %v115
    %135 = vmatpush.msra.mxu0 %v112
    %136 = vmatpush.msra.mxu0 %v109
    %137 = vmatpush.msra.mxu0 %v106
    %138 = vmatpush.msra.mxu0 %v103
    %139 = vmatpush.msra.mxu0 %v100
    %140 = vmatpush.msra.mxu0 %v97
    %141 = vmatpush.msra.mxu0 %v94
    %142 = vmatpush.msra.mxu0 %v91
    %143 = vmatpush.msra.mxu0 %v88
    %144 = vmatpush.msra.mxu0 %v85
    %145 = vmatpush.msra.mxu0 %v82
    %146 = vmatpush.msra.mxu0 %v79
    %147 = vmatpush.msra.mxu0 %v76
    %148 = vmatmul.f32.gmra.mxu0 %v60
    %v149 = vpop.f32.mrf.mxu0
    %v150 = vadd.f32 %v126, %v149
    %151 = vmatmul.f32.gmra.mxu0 %v61
    %v152 = vpop.f32.mrf.mxu0
    %v153 = vadd.f32 %v126, %v152
    %154 = vmatmul.f32.gmra.mxu0 %v62
    %v155 = vpop.f32.mrf.mxu0
    %v156 = vadd.f32 %v126, %v155
    %157 = vmatmul.f32.gmra.mxu0 %v63
    %v158 = vpop.f32.mrf.mxu0
    %v159 = vadd.f32 %v126, %v158
    %160 = vmatmul.f32.gmra.mxu0 %v64
    %v161 = vpop.f32.mrf.mxu0
    %v162 = vadd.f32 %v126, %v161
    %163 = vmatmul.f32.gmra.mxu0 %v65
    %v164 = vpop.f32.mrf.mxu0
    %v165 = vadd.f32 %v126, %v164
    %166 = vmatmul.f32.gmra.mxu0 %v66
    %v167 = vpop.f32.mrf.mxu0
    %v168 = vadd.f32 %v126, %v167
    %169 = vmatmul.f32.gmra.mxu0 %v67
    %v170 = vpop.f32.mrf.mxu0
    %v171 = vadd.f32 %v126, %v170
    %172 = vmatmul.f32.gmra.mxu0 %v68
    %v173 = vpop.f32.mrf.mxu0
    %v174 = vadd.f32 %v126, %v173
    %175 = vmatmul.f32.gmra.mxu0 %v69
    %v176 = vpop.f32.mrf.mxu0
    %v177 = vadd.f32 %v126, %v176
    %178 = vmatmul.f32.gmra.mxu0 %v70
    %v179 = vpop.f32.mrf.mxu0
    %v180 = vadd.f32 %v126, %v179
    %181 = vmatmul.f32.gmra.mxu0 %v71
    %v182 = vpop.f32.mrf.mxu0
    %v183 = vadd.f32 %v126, %v182
    %184 = vmatmul.f32.gmra.mxu0 %v72
    %v185 = vpop.f32.mrf.mxu0
    %v186 = vadd.f32 %v126, %v185
    %187 = vmatmul.f32.gmra.mxu0 %v73
    %v188 = vpop.f32.mrf.mxu0
    %v189 = vadd.f32 %v126, %v188
    %190 = vmatmul.f32.gmra.mxu0 %v74
    %v191 = vpop.f32.mrf.mxu0
    %v192 = vadd.f32 %v126, %v191
    %193 = vmatmul.f32.gmra.mxu0 %v75
    %v194 = vpop.f32.mrf.mxu0
    %v195 = vadd.f32 %v126, %v194
    %196 = vdwg.mxu0
    %197 = vmatpush.msra.mxu0 %v122
    %198 = vmatpush.msra.mxu0 %v119
    %199 = vmatpush.msra.mxu0 %v116
    %200 = vmatpush.msra.mxu0 %v113
    %201 = vmatpush.msra.mxu0 %v110
    %202 = vmatpush.msra.mxu0 %v107
    %203 = vmatpush.msra.mxu0 %v104
    %204 = vmatpush.msra.mxu0 %v101
    %205 = vmatpush.msra.mxu0 %v98
    %206 = vmatpush.msra.mxu0 %v95
    %207 = vmatpush.msra.mxu0 %v92
    %208 = vmatpush.msra.mxu0 %v89
    %209 = vmatpush.msra.mxu0 %v86
    %210 = vmatpush.msra.mxu0 %v83
    %211 = vmatpush.msra.mxu0 %v80
    %212 = vmatpush.msra.mxu0 %v77
    %213 = vmatmul.f32.gmra.mxu0 %v60
    %v214 = vpop.f32.mrf.mxu0
    %v215 = vadd.f32 %v127, %v214
    %216 = vmatmul.f32.gmra.mxu0 %v61
    %v217 = vpop.f32.mrf.mxu0
    %v218 = vadd.f32 %v127, %v217
    %219 = vmatmul.f32.gmra.mxu0 %v62
    %v220 = vpop.f32.mrf.mxu0
    %v221 = vadd.f32 %v127, %v220
    %222 = vmatmul.f32.gmra.mxu0 %v63
    %v223 = vpop.f32.mrf.mxu0
    %v224 = vadd.f32 %v127, %v223
    %225 = vmatmul.f32.gmra.mxu0 %v64
    %v226 = vpop.f32.mrf.mxu0
    %v227 = vadd.f32 %v127, %v226
    %228 = vmatmul.f32.gmra.mxu0 %v65
    %v229 = vpop.f32.mrf.mxu0
    %v230 = vadd.f32 %v127, %v229
    %231 = vmatmul.f32.gmra.mxu0 %v66
    %v232 = vpop.f32.mrf.mxu0
    %v233 = vadd.f32 %v127, %v232
    %234 = vmatmul.f32.gmra.mxu0 %v67
    %v235 = vpop.f32.mrf.mxu0
    %v236 = vadd.f32 %v127, %v235
    %237 = vmatmul.f32.gmra.mxu0 %v68
    %v238 = vpop.f32.mrf.mxu0
    %v239 = vadd.f32 %v127, %v238
    %240 = vmatmul.f32.gmra.mxu0 %v69
    %v241 = vpop.f32.mrf.mxu0
    %v242 = vadd.f32 %v127, %v241
    %243 = vmatmul.f32.gmra.mxu0 %v70
    %v244 = vpop.f32.mrf.mxu0
    %v245 = vadd.f32 %v127, %v244
    %246 = vmatmul.f32.gmra.mxu0 %v71
    %v247 = vpop.f32.mrf.mxu0
    %v248 = vadd.f32 %v127, %v247
    %249 = vmatmul.f32.gmra.mxu0 %v72
    %v250 = vpop.f32.mrf.mxu0
    %v251 = vadd.f32 %v127, %v250
    %252 = vmatmul.f32.gmra.mxu0 %v73
    %v253 = vpop.f32.mrf.mxu0
    %v254 = vadd.f32 %v127, %v253
    %255 = vmatmul.f32.gmra.mxu0 %v74
    %v256 = vpop.f32.mrf.mxu0
    %v257 = vadd.f32 %v127, %v256
    %258 = vmatmul.f32.gmra.mxu0 %v75
    %v259 = vpop.f32.mrf.mxu0
    %v260 = vadd.f32 %v127, %v259
    %261 = vdwg.mxu0
    %262 = vmatpush.msra.mxu0 %v123
    %263 = vmatpush.msra.mxu0 %v120
    %264 = vmatpush.msra.mxu0 %v117
    %265 = vmatpush.msra.mxu0 %v114
    %266 = vmatpush.msra.mxu0 %v111
    %267 = vmatpush.msra.mxu0 %v108
    %268 = vmatpush.msra.mxu0 %v105
    %269 = vmatpush.msra.mxu0 %v102
    %270 = vmatpush.msra.mxu0 %v99
    %271 = vmatpush.msra.mxu0 %v96
    %272 = vmatpush.msra.mxu0 %v93
    %273 = vmatpush.msra.mxu0 %v90
    %274 = vmatpush.msra.mxu0 %v87
    %275 = vmatpush.msra.mxu0 %v84
    %276 = vmatpush.msra.mxu0 %v81
    %277 = vmatpush.msra.mxu0 %v78
    %278 = vmatmul.f32.gmra.mxu0 %v60
    %v279 = vpop.f32.mrf.mxu0
    %v280 = vadd.f32 %v128, %v279
    %281 = vmatmul.f32.gmra.mxu0 %v61
    %v282 = vpop.f32.mrf.mxu0
    %v283 = vadd.f32 %v128, %v282
    %284 = vmatmul.f32.gmra.mxu0 %v62
    %v285 = vpop.f32.mrf.mxu0
    %v286 = vadd.f32 %v128, %v285
    %287 = vmatmul.f32.gmra.mxu0 %v63
    %v288 = vpop.f32.mrf.mxu0
    %v289 = vadd.f32 %v128, %v288
    %290 = vmatmul.f32.gmra.mxu0 %v64
    %v291 = vpop.f32.mrf.mxu0
    %v292 = vadd.f32 %v128, %v291
    %293 = vmatmul.f32.gmra.mxu0 %v65
    %v294 = vpop.f32.mrf.mxu0
    %v295 = vadd.f32 %v128, %v294
    %296 = vmatmul.f32.gmra.mxu0 %v66
    %v297 = vpop.f32.mrf.mxu0
    %v298 = vadd.f32 %v128, %v297
    %299 = vmatmul.f32.gmra.mxu0 %v67
    %v300 = vpop.f32.mrf.mxu0
    %v301 = vadd.f32 %v128, %v300
    %302 = vmatmul.f32.gmra.mxu0 %v68
    %v303 = vpop.f32.mrf.mxu0
    %v304 = vadd.f32 %v128, %v303
    %305 = vmatmul.f32.gmra.mxu0 %v69
    %v306 = vpop.f32.mrf.mxu0
    %v307 = vadd.f32 %v128, %v306
    %308 = vmatmul.f32.gmra.mxu0 %v70
    %v309 = vpop.f32.mrf.mxu0
    %v310 = vadd.f32 %v128, %v309
    %311 = vmatmul.f32.gmra.mxu0 %v71
    %v312 = vpop.f32.mrf.mxu0
    %v313 = vadd.f32 %v128, %v312
    %314 = vmatmul.f32.gmra.mxu0 %v72
    %v315 = vpop.f32.mrf.mxu0
    %v316 = vadd.f32 %v128, %v315
    %317 = vmatmul.f32.gmra.mxu0 %v73
    %v318 = vpop.f32.mrf.mxu0
    %v319 = vadd.f32 %v128, %v318
    %320 = vmatmul.f32.gmra.mxu0 %v74
    %v321 = vpop.f32.mrf.mxu0
    %v322 = vadd.f32 %v128, %v321
    %323 = vmatmul.f32.gmra.mxu0 %v75
    %v324 = vpop.f32.mrf.mxu0
    %v325 = vadd.f32 %v128, %v324
    %326 = vdwg.mxu0
    %327 = vst [vmem:[#allocation8] sm:$0xff] %v150
    %328 = vst [vmem:[#allocation8 + $0x8] sm:$0xff] %v215
    %329 = vst [vmem:[#allocation8 + $0x10] sm:$0xff] %v280
    %330 = vst [vmem:[#allocation8 + $0x18] sm:$0xff] %v153
    %331 = vst [vmem:[#allocation8 + $0x20] sm:$0xff] %v218
    %332 = vst [vmem:[#allocation8 + $0x28] sm:$0xff] %v283
    %333 = vst [vmem:[#allocation8 + $0x30] sm:$0xff] %v156
    %334 = vst [vmem:[#allocation8 + $0x38] sm:$0xff] %v221
    %335 = vst [vmem:[#allocation8 + $0x40] sm:$0xff] %v286
    %336 = vst [vmem:[#allocation8 + $0x48] sm:$0xff] %v159
    %337 = vst [vmem:[#allocation8 + $0x50] sm:$0xff] %v224
    %338 = vst [vmem:[#allocation8 + $0x58] sm:$0xff] %v289
    %339 = vst [vmem:[#allocation8 + $0x60] sm:$0xff] %v162
    %340 = vst [vmem:[#allocation8 + $0x68] sm:$0xff] %v227
    %341 = vst [vmem:[#allocation8 + $0x70] sm:$0xff] %v292
    %342 = vst [vmem:[#allocation8 + $0x78] sm:$0xff] %v165
    %343 = vst [vmem:[#allocation8 + $0x80] sm:$0xff] %v230
    %344 = vst [vmem:[#allocation8 + $0x88] sm:$0xff] %v295
    %345 = vst [vmem:[#allocation8 + $0x90] sm:$0xff] %v168
    %346 = vst [vmem:[#allocation8 + $0x98] sm:$0xff] %v233
    %347 = vst [vmem:[#allocation8 + $0xa0] sm:$0xff] %v298
    %348 = vst [vmem:[#allocation8 + $0xa8] sm:$0xff] %v171
    %349 = vst [vmem:[#allocation8 + $0xb0] sm:$0xff] %v236
    %350 = vst [vmem:[#allocation8 + $0xb8] sm:$0xff] %v301
    %351 = vst [vmem:[#allocation8 + $0xc0] sm:$0xff] %v174
    %352 = vst [vmem:[#allocation8 + $0xc8] sm:$0xff] %v239
    %353 = vst [vmem:[#allocation8 + $0xd0] sm:$0xff] %v304
    %354 = vst [vmem:[#allocation8 + $0xd8] sm:$0xff] %v177
    %355 = vst [vmem:[#allocation8 + $0xe0] sm:$0xff] %v242
    %356 = vst [vmem:[#allocation8 + $0xe8] sm:$0xff] %v307
    %357 = vst [vmem:[#allocation8 + $0xf0] sm:$0xff] %v180
    %358 = vst [vmem:[#allocation8 + $0xf8] sm:$0xff] %v245
    %359 = vst [vmem:[#allocation8 + $0x100] sm:$0xff] %v310
    %360 = vst [vmem:[#allocation8 + $0x108] sm:$0xff] %v183
    %361 = vst [vmem:[#allocation8 + $0x110] sm:$0xff] %v248
    %362 = vst [vmem:[#allocation8 + $0x118] sm:$0xff] %v313
    %363 = vst [vmem:[#allocation8 + $0x120] sm:$0xff] %v186
    %364 = vst [vmem:[#allocation8 + $0x128] sm:$0xff] %v251
    %365 = vst [vmem:[#allocation8 + $0x130] sm:$0xff] %v316
    %366 = vst [vmem:[#allocation8 + $0x138] sm:$0xff] %v189
    %367 = vst [vmem:[#allocation8 + $0x140] sm:$0xff] %v254
    %368 = vst [vmem:[#allocation8 + $0x148] sm:$0xff] %v319
    %369 = vst [vmem:[#allocation8 + $0x150] sm:$0xff] %v192
    %370 = vst [vmem:[#allocation8 + $0x158] sm:$0xff] %v257
    %371 = vst [vmem:[#allocation8 + $0x160] sm:$0xff] %v322
    %372 = vst [vmem:[#allocation8 + $0x168] sm:$0xff] %v195
    %373 = vst [vmem:[#allocation8 + $0x170] sm:$0xff] %v260
    %374 = vst [vmem:[#allocation8 + $0x178] sm:$0xff] %v325
    // Predicated region
    $region26: #{tpu_custom_call.1} parent=1 // pred_check
      _
    $region27: #{tpu_custom_call.1} parent=1 // pred_check_branch
      %376 = sbr.rel (0) target = $region29
    $region28: #{tpu_custom_call.1} parent=1 // pred_region
      %378 = vsyncadd [#allocation4], 0
      %s379 = sshll.u32 [#allocation8], 4
      %s380 = int_to_ptr.vmem [resolvable:$true] %s379
      %s381 = sshll.u32 %s3, 4
      %s382 = int_to_ptr.hbm [resolvable:$true] %s381
      %387 = dma.vmem_to_hbm [thread:$0]  %s380, 6144, %s382, [#allocation4], 384, 384, 24
    $region29: #{tpu_custom_call.1} parent=1 // pred_fallthru
      _
    // Predicated region
    $region30: #{tpu_custom_call.1} parent=1 // pred_check
      _
    $region31: #{tpu_custom_call.1} parent=1 // pred_check_branch
      %389 = sbr.rel (0) target = $region33
    $region32: #{tpu_custom_call.1} parent=1 // pred_region
      %391 = dma.done [#allocation4], 6144
    $region33: #{tpu_custom_call.1} parent=1 // pred_fallthru
      _
    %392 = vsyncpa [#allocation3], 1
    %393 = vsyncpa [#allocation6], 1
    %394 = vsyncpa [#allocation4], 1

</llo_original>
